<compile_context>
chip_gen: v6e
topology: v6e:2x2x1
jax: 0.10.0
libtpu: 0.0.40
codegen_flags: <defaults>
</compile_context>

<pallas_src>
import jax
import jax.numpy as jnp
from jax.experimental import pallas as pl
from jax.experimental.pallas import tpu as pltpu

LANE = 128                                   # TPU vreg lane width
_VMEM_TILE_BUDGET = 12 * 1024 * 1024         # double-buffered x+out tiles budget (bytes)
_SMALL_BATCH_THRESHOLD = 512                 # below this, plain XLA beats a pallas launch


def _linear_kernel(x_ref, w_ref, b_ref, o_ref):
    # x_ref: (TM, IN)   w_ref: (IN, N_PAD)   b_ref: (1, N_PAD)   o_ref: (TM, N_PAD)
    acc = jnp.dot(x_ref[...], w_ref[...], preferred_element_type=jnp.float32)
    o_ref[...] = (acc + b_ref[...]).astype(o_ref.dtype)


def prepare_params(weight, bias):
    """One-time (per-parameter-update) packing of the PyTorch-layout params.

    weight: (class_num, in_channels), bias: (class_num,)
    Returns:
      w_pad: (in_channels, N_PAD)  -- transposed to MXU-native (K, N), zero-padded lanes
      b_pad: (1, N_PAD)
    where N_PAD = class_num rounded up to a multiple of 128 lanes.
    """
    class_num, in_ch = weight.shape
    n_pad = max(LANE, ((class_num + LANE - 1) // LANE) * LANE)
    w_pad = jnp.zeros((in_ch, n_pad), weight.dtype).at[:, :class_num].set(weight.T)
    b_pad = jnp.zeros((1, n_pad), bias.dtype).at[0, :class_num].set(bias)
    return w_pad, b_pad


def _pick_tm(B, in_ch, n_pad, block_rows):
    """Batch row-tile: big enough for HBM roofline, small enough for VMEM, and
    split in two whenever possible so v7x's two TensorCores both get work."""
    bytes_per_row = 2 * (in_ch + n_pad) * 4          # double-buffered x + out rows, f32
    vmem_rows = max(8, (_VMEM_TILE_BUDGET // bytes_per_row) // 8 * 8)
    tm = min(block_rows, vmem_rows, B)
    if tm < B:
        tm = max(8, (tm // 8) * 8)                   # sublane-aligned strict tile
    if B >= 16 and pl.cdiv(B, tm) < 2:               # guarantee >= 2 grid steps
        half = (B + 1) // 2
        tm = ((half + 7) // 8) * 8
    return tm


def logistic_regression_forward(x, w_pad, b_pad, class_num, *,
                                block_rows=8192,
                                force_pallas=False,
                                return_padded=False,
                                x_buffer_depth=2):
    """x: (B, in_channels); w_pad: (in_channels, N_PAD); b_pad: (1, N_PAD).

    Returns (B, class_num) = x @ W.T + b   (or the lane-dense (B, N_PAD) slab if
    return_padded=True; padded columns are exactly zero).
    """
    B, in_ch = x.shape
    assert w_pad.shape[0] == in_ch
    n_pad = w_pad.shape[1]

    # Fast path: at tiny B the pallas_call launch dominates; let XLA do it.
    if B < _SMALL_BATCH_THRESHOLD and not force_pallas:
        out = x @ w_pad + b_pad                       # (B, n_pad)
        return out if return_padded else out[:, :class_num]

    tm = _pick_tm(B, in_ch, n_pad, block_rows)
    grid_steps = pl.cdiv(B, tm)

    x_spec_kwargs = {}
    if x_buffer_depth and x_buffer_depth > 2:
        # Deeper buffering on the only streamed input; useful for very long grids.
        x_spec_kwargs = dict(pipeline_mode=pl.Buffered(x_buffer_depth))

    out = pl.pallas_call(
        _linear_kernel,
        out_shape=jax.ShapeDtypeStruct((B, n_pad), x.dtype),
        grid_spec=pltpu.PrefetchScalarGridSpec(
            num_scalar_prefetch=0,
            grid=(grid_steps,),
            in_specs=[
                pl.BlockSpec((tm, in_ch), lambda i: (i, 0), **x_spec_kwargs),  # x tile
                pl.BlockSpec((in_ch, n_pad), lambda i: (0, 0)),   # resident (K,N) weight
                pl.BlockSpec((1, n_pad), lambda i: (0, 0)),       # resident bias
            ],
            out_specs=pl.BlockSpec((tm, n_pad), lambda i: (i, 0)),
        ),
        compiler_params=pltpu.CompilerParams(
            dimension_semantics=("parallel",),        # batch tiles are independent
        ),
    )(x, w_pad, b_pad)

    return out if return_padded else out[:, :class_num]


if __name__ == "__main__":
    in_channels, class_num = 32, 10

    key = jax.random.PRNGKey(0)
    kx, kw, kb, kx2 = jax.random.split(key, 4)

    # Deterministic init mimicking torch.nn.Linear (uniform +/- 1/sqrt(in_channels)).
    bound = 1.0 / (in_channels ** 0.5)
    weight = jax.random.uniform(kw, (class_num, in_channels),
                                minval=-bound, maxval=bound, dtype=jnp.float32)
    bias = jax.random.uniform(kb, (class_num,),
                              minval=-bound, maxval=bound, dtype=jnp.float32)

    # One-time parameter packing (outside the hot forward path).
    w_pad, b_pad = prepare_params(weight, bias)

    # 1) Module's natural tiny shape (B=8): goes through the small-batch fast path.
    x_small = jax.random.normal(kx, (8, in_channels), dtype=jnp.float32)
    out_small = jax.block_until_ready(
        logistic_regression_forward(x_small, w_pad, b_pad, class_num))
    ref_small = x_small @ weight.T + bias
    assert out_small.shape == (8, class_num)
    assert jnp.allclose(out_small, ref_small, atol=1e-5, rtol=1e-5)

    # 2) Same tiny shape, forced through the Pallas kernel (single full-batch tile).
    out_small_pl = jax.block_until_ready(
        logistic_regression_forward(x_small, w_pad, b_pad, class_num,
                                    force_pallas=True))
    assert jnp.allclose(out_small_pl, ref_small, atol=1e-5, rtol=1e-5)

    # 3) Larger ragged batch (B=1000): Pallas path, 2 grid steps (megacore-shardable),
    #    no jnp.pad — the trailing partial block is masked by the pipeline.
    x_big = jax.random.normal(kx2, (1000, in_channels), dtype=jnp.float32)
    out_big = jax.block_until_ready(
        logistic_regression_forward(x_big, w_pad, b_pad, class_num))
    ref_big = x_big @ weight.T + bias
    assert out_big.shape == (1000, class_num)
    assert jnp.allclose(out_big, ref_big, atol=1e-4, rtol=1e-5)

    print("KERNEL_OK")
</pallas_src>

<mosaic_0001>
module attributes {stable_mosaic.version = 11 : i64} {
  func.func @_linear_kernel(%arg0: i32, %arg1: memref<8x32xf32, #tpu.memory_space<vmem>>, %arg2: memref<32x128xf32, #tpu.memory_space<vmem>>, %arg3: memref<1x128xf32, #tpu.memory_space<vmem>>, %arg4: memref<8x128xf32, #tpu.memory_space<vmem>>) attributes {dimension_semantics = [#tpu.dimension_semantics<parallel>], iteration_bounds = array<i64: 1>, scalar_prefetch = 0 : i64, scratch_operands = 0 : i64, tpu.core_type = #tpu.core_type<tc>, window_params = [{transform_indices = @transform_0, window_bounds = array<i64: 8, 32>}, {pipeline_mode = #tpu.pipeline_mode<synchronous>, transform_indices = @transform_1, window_bounds = array<i64: 32, 128>}, {pipeline_mode = #tpu.pipeline_mode<synchronous>, transform_indices = @transform_2, window_bounds = array<i64: 1, 128>}, {transform_indices = @transform_3, window_bounds = array<i64: 8, 128>}]} {
    %c0 = arith.constant 0 : index
    %c0_0 = arith.constant 0 : index
    %0 = vector.load %arg1[%c0, %c0_0] : memref<8x32xf32, #tpu.memory_space<vmem>>, vector<8x32xf32>
    %c0_1 = arith.constant 0 : index
    %c0_2 = arith.constant 0 : index
    %1 = vector.load %arg2[%c0_1, %c0_2] : memref<32x128xf32, #tpu.memory_space<vmem>>, vector<32x128xf32>
    %cst = arith.constant dense<0.000000e+00> : vector<8x128xf32>
    %2 = tpu.matmul %0, %1, %cst {dimension_numbers = #tpu.dot_dimension_numbers<[1], [0], [0], [1], [0, 0, 1, 1], [], []>} : vector<8x32xf32>, vector<32x128xf32>, vector<8x128xf32> -> vector<8x128xf32>
    %c0_3 = arith.constant 0 : index
    %c0_4 = arith.constant 0 : index
    %3 = vector.load %arg3[%c0_3, %c0_4] : memref<1x128xf32, #tpu.memory_space<vmem>>, vector<1x128xf32>
    %4 = vector.broadcast %3 : vector<1x128xf32> to vector<8x128xf32>
    %5 = arith.addf %2, %4 : vector<8x128xf32>
    %c0_5 = arith.constant 0 : index
    %c0_6 = arith.constant 0 : index
    %6 = vector.load %arg4[%c0_5, %c0_6] : memref<8x128xf32, #tpu.memory_space<vmem>>, vector<8x128xf32>
    tpu.vector_store %arg4[%c0_5, %c0_6], %5 {strides = array<i32>} : memref<8x128xf32, #tpu.memory_space<vmem>>, vector<8x128xf32>,
    return
  }
  func.func @transform_0(%arg0: i32) -> (i32, i32) {
    %c0_i32 = arith.constant 0 : i32
    %c0_i32_0 = arith.constant 0 : i32
    return %arg0, %c0_i32 : i32, i32
  }
  func.func @transform_1(%arg0: i32) -> (i32, i32) {
    %c0_i32 = arith.constant 0 : i32
    %c0_i32_0 = arith.constant 0 : i32
    %c0_i32_1 = arith.constant 0 : i32
    return %c0_i32, %c0_i32_0 : i32, i32
  }
  func.func @transform_2(%arg0: i32) -> (i32, i32) {
    %c0_i32 = arith.constant 0 : i32
    %c0_i32_0 = arith.constant 0 : i32
    %c0_i32_1 = arith.constant 0 : i32
    return %c0_i32, %c0_i32_0 : i32, i32
  }
  func.func @transform_3(%arg0: i32) -> (i32, i32) {
    %c0_i32 = arith.constant 0 : i32
    %c0_i32_0 = arith.constant 0 : i32
    return %arg0, %c0_i32 : i32, i32
  }
}

</mosaic_0001>

<llo_original>
// kernel: tpu_custom_call.1
$region0: #{tpu_custom_call.1}
  #allocation0 [shape = 'u32[]', space=smem, size = 0x4, offset = 0x4, fixed_abs, tag = 'smem constant byte address 0x4 - core index']
  #allocation1 [shape = 'u32[144,128]{1,0:T(1,128)}', space=vmem, size = 0x12000, scoped, tag = 'internal scratch']
  %s0 = inlined_call_operand.hbm [shape: f32[8,32], index: 0, kind: input, shape index: {}]
  %s1 = inlined_call_operand.hbm [shape: f32[32,128], index: 1, kind: input, shape index: {}]
  %s2 = inlined_call_operand.vmem [shape: f32[1,128], index: 2, kind: input, shape index: {}]
  %s3 = inlined_call_operand.hbm [shape: f32[8,128], index: 3, kind: output, shape index: {}]
  %s4 = sld [smem:[#allocation0]]
  $region30: #{tpu_custom_call.1} parent=0
    _
  %s6 = ssub.s32 1, %s4
  %s7 = scalar_select 0, %s6, %s4
  $region1: #{tpu_custom_call.1} parent=0
    #allocation2 [shape = 'u8[4096]{0}', space=vmem, size = 0x1000, scoped, tag = 'input window, operand 0, single buffered']
    #allocation3 [shape = 's32[1]{0}', space=sflag, size = 0x4, scoped, tag = 'scoped memory for tpu_custom_call.1']
    #allocation4 [shape = 's32[1]{0}', space=sflag, size = 0x4, scoped, tag = 'scoped memory for tpu_custom_call.1']
    #allocation5 [shape = 'u8[16384]{0}', space=vmem, size = 0x4000, scoped, tag = 'input window, operand 1, single buffered']
    #allocation6 [shape = 's32[1]{0}', space=sflag, size = 0x4, scoped, tag = 'scoped memory for tpu_custom_call.1']
    #allocation7 [shape = 'u8[4096]{0}', space=vmem, size = 0x1000, scoped, tag = 'output window, operand 0, single buffered']
    %8 = vsyncpa [#allocation3], 0
    %9 = vsyncpa [#allocation6], 0
    %10 = vsyncpa [#allocation4], 0
    // Predicated region
    $region2: #{tpu_custom_call.1} parent=1 // pred_check
      _
    $region3: #{tpu_custom_call.1} parent=1 // pred_check_branch
      %12 = sbr.rel (0) target = $region5
    $region4: #{tpu_custom_call.1} parent=1 // pred_region
      %s14 = ssub.s32 128, 128
      %15 = vsyncadd [#allocation3], %s14
      %s17 = sshll.u32 [#allocation2], 4
      %s18 = int_to_ptr.vmem [resolvable:$true] %s17
      %20 = dma.hbm_to_vmem [thread:$0]  %s0, 128, %s18, [#allocation3]
    $region5: #{tpu_custom_call.1} parent=1 // pred_fallthru
      _
    // Predicated region
    $region6: #{tpu_custom_call.1} parent=1 // pred_check
      _
    $region7: #{tpu_custom_call.1} parent=1 // pred_check_branch
      %22 = sbr.rel (0) target = $region9
    $region8: #{tpu_custom_call.1} parent=1 // pred_region
      %s24 = ssub.s32 512, 512
      %25 = vsyncadd [#allocation6], %s24
      %s26 = sshll.u32 [#allocation5], 4
      %s27 = int_to_ptr.vmem [resolvable:$true] %s26
      %32 = dma.hbm_to_vmem [thread:$0]  %s1, 512, %s27, [#allocation6], 128, 128, 8
    $region9: #{tpu_custom_call.1} parent=1 // pred_fallthru
      _
    // Predicated region
    $region10: #{tpu_custom_call.1} parent=1 // pred_check
      _
    $region11: #{tpu_custom_call.1} parent=1 // pred_check_branch
      %34 = sbr.rel (0) target = $region13
    $region12: #{tpu_custom_call.1} parent=1 // pred_region
      _
    $region13: #{tpu_custom_call.1} parent=1 // pred_fallthru
      _
    // Predicated region
    $region14: #{tpu_custom_call.1} parent=1 // pred_check
      _
    $region15: #{tpu_custom_call.1} parent=1 // pred_check_branch
      %36 = sbr.rel (0) target = $region17
    $region16: #{tpu_custom_call.1} parent=1 // pred_region
      %37 = dma.done [#allocation3], 128
    $region17: #{tpu_custom_call.1} parent=1 // pred_fallthru
      _
    // Predicated region
    $region18: #{tpu_custom_call.1} parent=1 // pred_check
      _
    $region19: #{tpu_custom_call.1} parent=1 // pred_check_branch
      %39 = sbr.rel (0) target = $region21
    $region20: #{tpu_custom_call.1} parent=1 // pred_region
      %40 = dma.done [#allocation6], 512
    $region21: #{tpu_custom_call.1} parent=1 // pred_fallthru
      _
    %v41 = vld [vmem:[#allocation2] sm:$0xff]
    %v42 = vld [vmem:[#allocation5] sm:$0xff]
    %v43 = vld [vmem:[#allocation5 + $0x8] sm:$0xff]
    %v44 = vld [vmem:[#allocation5 + $0x10] sm:$0xff]
    %v45 = vld [vmem:[#allocation5 + $0x18] sm:$0xff]
    %v46 = vld [vmem:[%s2] sm:$0x1]
    %v48 = vlaneseq
    %v49 = vshrl.u32 %v48, 7
    %v50 = vsub.s32 0, %v49
    %v51 = vrot.slane %v46, %v50
    %vm53 = vcmask 261120
    %v55 = vsel %vm53, %v41, 0
    %57 = vmatprep.subr.mxu0 0.0
    %58 = vmatpush1.msra.mxu0 0.0
    %59 = vmatprep.subr.mxu0 0.0
    %60 = vmatpush1.msra.mxu0 0.0
    %61 = vmatprep.subr.mxu0 0.0
    %62 = vmatpush1.msra.mxu0 0.0
    %63 = vmatprep.subr.mxu0 0.0
    %64 = vmatpush1.msra.mxu0 0.0
    %65 = vmatprep.subr.mxu0 0.0
    %66 = vmatpush1.msra.mxu0 0.0
    %67 = vmatprep.subr.mxu0 0.0
    %68 = vmatpush1.msra.mxu0 0.0
    %69 = vmatprep.subr.mxu0 0.0
    %70 = vmatpush1.msra.mxu0 0.0
    %71 = vmatprep.subr.mxu0 0.0
    %72 = vmatpush1.msra.mxu0 0.0
    %73 = vmatprep.subr.mxu0 0.0
    %74 = vmatpush1.msra.mxu0 0.0
    %75 = vmatprep.subr.mxu0 0.0
    %76 = vmatpush1.msra.mxu0 0.0
    %77 = vmatprep.subr.mxu0 0.0
    %78 = vmatpush1.msra.mxu0 0.0
    %79 = vmatprep.subr.mxu0 0.0
    %80 = vmatpush1.msra.mxu0 0.0
    %81 = vmatprep.subr.mxu0 0.0
    %82 = vmatpush1.msra.mxu0 %v45
    %83 = vmatprep.subr.mxu0 0.0
    %84 = vmatpush1.msra.mxu0 %v44
    %85 = vmatprep.subr.mxu0 0.0
    %86 = vmatpush1.msra.mxu0 %v43
    %87 = vmatprep.subr.mxu0 0.0
    %88 = vmatpush1.msra.mxu0 %v42
    %89 = vmatprep.subr.mxu0 0.0
    %90 = vmatpush2.msra.mxu0 0.0
    %91 = vmatprep.subr.mxu0 0.0
    %92 = vmatpush2.msra.mxu0 0.0
    %93 = vmatprep.subr.mxu0 0.0
    %94 = vmatpush2.msra.mxu0 0.0
    %95 = vmatprep.subr.mxu0 0.0
    %96 = vmatpush2.msra.mxu0 0.0
    %97 = vmatprep.subr.mxu0 0.0
    %98 = vmatpush2.msra.mxu0 0.0
    %99 = vmatprep.subr.mxu0 0.0
    %100 = vmatpush2.msra.mxu0 0.0
    %101 = vmatprep.subr.mxu0 0.0
    %102 = vmatpush2.msra.mxu0 0.0
    %103 = vmatprep.subr.mxu0 0.0
    %104 = vmatpush2.msra.mxu0 0.0
    %105 = vmatprep.subr.mxu0 0.0
    %106 = vmatpush2.msra.mxu0 0.0
    %107 = vmatprep.subr.mxu0 0.0
    %108 = vmatpush2.msra.mxu0 0.0
    %109 = vmatprep.subr.mxu0 0.0
    %110 = vmatpush2.msra.mxu0 0.0
    %111 = vmatprep.subr.mxu0 0.0
    %112 = vmatpush2.msra.mxu0 0.0
    %113 = vmatprep.subr.mxu0 0.0
    %114 = vmatpush2.msra.mxu0 0.0
    %115 = vmatprep.subr.mxu0 0.0
    %116 = vmatpush2.msra.mxu0 0.0
    %117 = vmatprep.subr.mxu0 0.0
    %118 = vmatpush2.msra.mxu0 0.0
    %119 = vmatprep.subr.mxu0 0.0
    %120 = vmatpush2.msra.mxu0 0.0
    %121 = vmatprep.mubr.f32.mxu0 0.0
    %122 = vmatmul.mubr.f32.gmra.mxu0 %v55
    %v123 = vpop.f32.mrf.mxu0
    %v124 = vadd.f32 %v51, %v123
    %v125 = vpop.f32.mrf.mxu0
    %126 = vdwg.mxu0
    %127 = vst [vmem:[#allocation7] sm:$0xff] %v124
    // Predicated region
    $region22: #{tpu_custom_call.1} parent=1 // pred_check
      _
    $region23: #{tpu_custom_call.1} parent=1 // pred_check_branch
      %129 = sbr.rel (0) target = $region25
    $region24: #{tpu_custom_call.1} parent=1 // pred_region
      %s131 = ssub.s32 128, 128
      %132 = vsyncadd [#allocation4], %s131
      %s134 = sshll.u32 [#allocation7], 4
      %s135 = int_to_ptr.vmem [resolvable:$true] %s134
      %137 = dma.vmem_to_hbm [thread:$0]  %s135, 128, %s3, [#allocation4]
    $region25: #{tpu_custom_call.1} parent=1 // pred_fallthru
      _
    // Predicated region
    $region26: #{tpu_custom_call.1} parent=1 // pred_check
      _
    $region27: #{tpu_custom_call.1} parent=1 // pred_check_branch
      %139 = sbr.rel (0) target = $region29
    $region28: #{tpu_custom_call.1} parent=1 // pred_region
      %140 = dma.done [#allocation4], 128
    $region29: #{tpu_custom_call.1} parent=1 // pred_fallthru
      _
    %141 = vsyncpa [#allocation3], 1
    %142 = vsyncpa [#allocation6], 1
    %143 = vsyncpa [#allocation4], 1

</llo_original>
